<compile_context>
chip_gen: v6e
topology: v6e:2x2x1
jax: 0.10.0
libtpu: 0.0.40
codegen_flags: <defaults>
</compile_context>

<pallas_src>
import functools

import jax
import jax.numpy as jnp
from jax import lax
from jax.experimental import pallas as pl
from jax.experimental.pallas import tpu as pltpu


_VMEM_BUDGET = 8 * 1024 * 1024          # target bytes for the dominant per-block buffers
_VMEM_LIMIT = 32 * 1024 * 1024          # scoped VMEM we request (safe on v5e/v6e/v7x)
_TRANSPOSED_PATH_LIMIT = 24 * 1024 * 1024  # if even the minimum rows-on-lanes tile
                                           # exceeds this, use the row-layout fallback


def get_positive_k(k, n):
    """Same rule as TopKMaxPooling.get_positive_k (same Python round())."""
    if k <= 0:
        return 0
    elif k < 1:
        return round(k * n)
    elif k > n:
        return int(n)
    else:
        return int(k)


def _round_up(x, m):
    return ((x + m - 1) // m) * m


def _round_down(x, m):
    return (x // m) * m


def _pick_tile(rows, bytes_per_unit, granule, max_tile=4096):
    """Largest tile along the tiled (row) axis whose block fits the VMEM budget."""
    cap = _VMEM_BUDGET // max(1, bytes_per_unit)
    cap = min(max_tile, max(granule, _round_down(cap, granule)))
    if rows <= cap:
        if rows >= 4 * granule:
            # Keep at least two grid steps so both v7x TensorCores get work.
            half = -(-rows // 2)
            return min(cap, _round_up(half, granule))
        return rows  # equals the full array dim -> exempt from granule rule
    return cap


# --------------------------------------------------------------------------
# Kernels
# --------------------------------------------------------------------------

def _max_k1_kernel(x_ref, o_ref):
    """k == 1 fast path: plain global max pooling over the lane (spatial) axis."""
    # Block is (row_tile, n); n equals the full array dim, so no lane padding
    # is visible and the reduction needs no explicit masking.
    o_ref[...] = jnp.max(x_ref[...], axis=-1, keepdims=True).astype(jnp.float32)


def _topk_lanes_kernel(x_ref, o_ref, *, k, unroll):
    """k > 1, rows-on-lanes layout.

    Block is (n, lane_tile): spatial on sublanes, rows on the 128-lane axis.
    Each of the k selection rounds does a sublane-axis max / first-index min,
    which is mostly elementwise VPU work with a short in-vreg XLU finish.
    Masking only the first occurrence of the max removes exactly one element
    per round (duplicates are kept), matching torch.sort top-k sums.
    """
    cur0 = x_ref[...].astype(jnp.float32)                     # (n, L)
    n, l = cur0.shape
    row_idx = lax.broadcasted_iota(jnp.int32, (n, l), 0)      # sublane iota
    neg_inf = jnp.float32(-jnp.inf)

    def body(_, carry):
        acc, cur = carry
        m = jnp.max(cur, axis=0, keepdims=True)                                   # (1, L)
        first = jnp.min(jnp.where(cur == m, row_idx, n), axis=0, keepdims=True)   # (1, L)
        cur = jnp.where(row_idx == first, neg_inf, cur)
        return acc + m, cur

    acc0 = jnp.zeros((1, l), jnp.float32)
    acc, _ = lax.fori_loop(0, k, body, (acc0, cur0), unroll=unroll)
    o_ref[...] = (acc * jnp.float32(1.0 / k)).astype(o_ref.dtype)


def _topk_rows_kernel(x_ref, o_ref, *, k, unroll):
    """k > 1 fallback for very large spatial extents (row layout, lane reduce)."""
    cur0 = x_ref[...].astype(jnp.float32)                     # (R, n)
    r, n = cur0.shape
    col = lax.broadcasted_iota(jnp.int32, (r, n), 1)
    neg_inf = jnp.float32(-jnp.inf)

    def body(_, carry):
        acc, cur = carry
        m = jnp.max(cur, axis=-1, keepdims=True)                                  # (R, 1)
        first = jnp.min(jnp.where(cur == m, col, n), axis=-1, keepdims=True)      # (R, 1)
        cur = jnp.where(col == first, neg_inf, cur)
        return acc + m, cur

    acc0 = jnp.zeros((r, 1), jnp.float32)
    acc, _ = lax.fori_loop(0, k, body, (acc0, cur0), unroll=unroll)
    o_ref[...] = (acc * jnp.float32(1.0 / k)).astype(o_ref.dtype)


# --------------------------------------------------------------------------
# Wrapper
# --------------------------------------------------------------------------

def topk_max_pooling(x, kmax=1.0, *, _force_row_layout=False):
    """Pallas implementation of TopKMaxPooling.forward.

    x: (B, C, H, W) array.  Returns (B, C) in x.dtype.
    """
    b, c, h, w = x.shape
    n = h * w
    k = get_positive_k(kmax, n)
    if k == 0:
        # TODO(synk): torch would divide by zero here; return zeros instead.
        return jnp.zeros((b, c), x.dtype)

    rows = b * c
    itemsize = jnp.dtype(x.dtype).itemsize
    x2 = x.reshape(rows, n)                      # free reshape, native dtype

    compiler_params = pltpu.CompilerParams(
        dimension_semantics=("parallel",),
        vmem_limit_bytes=_VMEM_LIMIT)
    row_granule = max(8, 32 // itemsize)         # sublane packing granule per dtype
    unroll = k <= 8

    if k == 1:
        # Fast path: plain max pooling, row layout, no extra HBM traffic.
        n_lanes = _round_up(n, 128)
        row_tile = _pick_tile(rows, 2 * n_lanes * itemsize, row_granule)
        grid = pl.cdiv(rows, row_tile)
        out = pl.pallas_call(
            _max_k1_kernel,
            out_shape=jax.ShapeDtypeStruct((grid * row_tile, 1), jnp.float32),
            grid_spec=pltpu.PrefetchScalarGridSpec(
                num_scalar_prefetch=0,
                grid=(grid,),
                in_specs=[pl.BlockSpec((row_tile, n), lambda i: (i, 0))],
                out_specs=pl.BlockSpec((row_tile, 1), lambda i: (i, 0))),
            compiler_params=compiler_params,
        )(x2)
        res = out[:rows, 0]
    else:
        # Working-set estimate per row-on-lane column for the transposed path:
        # double-buffered native input + f32 working copy + i32 iota + slop.
        n_sub = _round_up(n, 8)
        bytes_per_col = n_sub * (2 * itemsize + 12)
        min_lane = rows if rows < 128 else 128
        use_transposed = (not _force_row_layout and
                          bytes_per_col * min_lane <= _TRANSPOSED_PATH_LIMIT)

        if use_transposed:
            lane_tile = _pick_tile(rows, bytes_per_col, 128)
            grid = pl.cdiv(rows, lane_tile)
            # One XLA transpose in HBM; k > 1 is compute-bound so this pass is
            # cheap and it lets every reduction run off the lane axis.
            xt = x2.T                                          # (n, rows)
            out = pl.pallas_call(
                functools.partial(_topk_lanes_kernel, k=k, unroll=unroll),
                out_shape=jax.ShapeDtypeStruct((1, grid * lane_tile), jnp.float32),
                grid_spec=pltpu.PrefetchScalarGridSpec(
                    num_scalar_prefetch=0,
                    grid=(grid,),
                    in_specs=[pl.BlockSpec((n, lane_tile), lambda j: (0, j))],
                    out_specs=pl.BlockSpec((1, lane_tile), lambda j: (0, j))),
                compiler_params=compiler_params,
            )(xt)
            res = out[0, :rows]
        else:
            # Spatial too large for the rows-on-lanes working set: row layout
            # with small row tiles (fits VMEM on every generation incl. v7x).
            n_lanes = _round_up(n, 128)
            bytes_per_row = n_lanes * (2 * itemsize + 12)
            row_tile = _pick_tile(rows, bytes_per_row, row_granule)
            grid = pl.cdiv(rows, row_tile)
            out = pl.pallas_call(
                functools.partial(_topk_rows_kernel, k=k, unroll=unroll),
                out_shape=jax.ShapeDtypeStruct((grid * row_tile, 1), jnp.float32),
                grid_spec=pltpu.PrefetchScalarGridSpec(
                    num_scalar_prefetch=0,
                    grid=(grid,),
                    in_specs=[pl.BlockSpec((row_tile, n), lambda i: (i, 0))],
                    out_specs=pl.BlockSpec((row_tile, 1), lambda i: (i, 0))),
                compiler_params=compiler_params,
            )(x2)
            res = out[:rows, 0]

    return res.reshape(b, c).astype(x.dtype)


def topk_max_pooling_ref(x, kmax=1.0):
    """Pure-JAX reference mirroring the PyTorch module."""
    b, c, h, w = x.shape
    n = h * w
    k = get_positive_k(kmax, n)
    flat = x.reshape(b, c, n)
    srt = -jnp.sort(-flat, axis=2)               # descending sort
    return (srt[:, :, :k].sum(axis=2) / k).astype(x.dtype)


if __name__ == "__main__":
    key = jax.random.PRNGKey(0)
    B, C, H, W = 2, 4, 16, 16
    x = jax.random.normal(key, (B, C, H, W), dtype=jnp.float32)

    cases = [
        dict(kmax=1.0),                           # k == 1 fast path (default)
        dict(kmax=3),                             # small k > 1: rows-on-lanes, unrolled
        dict(kmax=0.1),                           # fractional k (k = 26): rows-on-lanes
        dict(kmax=0.1, _force_row_layout=True),   # row-layout fallback path
    ]
    for case in cases:
        out = jax.block_until_ready(topk_max_pooling(x, **case))
        ref = topk_max_pooling_ref(x, kmax=case["kmax"])
        assert out.shape == (B, C), out.shape
        assert jnp.allclose(out, ref, atol=1e-5, rtol=1e-5), (
            f"mismatch for {case}: {out} vs {ref}")

    print("KERNEL_OK")
</pallas_src>

<mosaic_0001>
module attributes {stable_mosaic.version = 11 : i64} {
  func.func @_max_k1_kernel(%arg0: i32, %arg1: memref<8x256xf32, #tpu.memory_space<vmem>>, %arg2: memref<8x1xf32, #tpu.memory_space<vmem>>) attributes {dimension_semantics = [#tpu.dimension_semantics<parallel>], iteration_bounds = array<i64: 1>, scalar_prefetch = 0 : i64, scratch_operands = 0 : i64, tpu.core_type = #tpu.core_type<tc>, window_params = [{transform_indices = @transform_0, window_bounds = array<i64: 8, 256>}, {transform_indices = @transform_1, window_bounds = array<i64: 8, 1>}]} {
    %c0 = arith.constant 0 : index
    %c0_0 = arith.constant 0 : index
    %0 = vector.load %arg1[%c0, %c0_0] : memref<8x256xf32, #tpu.memory_space<vmem>>, vector<8x256xf32>
    %cst = arith.constant dense<0xFF800000> : vector<8xf32>
    %1 = vector.multi_reduction <maximumf>, %0, %cst [1] : vector<8x256xf32> to vector<8xf32>
    %2 = vector.shape_cast %1 : vector<8xf32> to vector<8x1xf32>
    %c0_1 = arith.constant 0 : index
    %c0_2 = arith.constant 0 : index
    %3 = vector.load %arg2[%c0_1, %c0_2] : memref<8x1xf32, #tpu.memory_space<vmem>>, vector<8x1xf32>
    tpu.vector_store %arg2[%c0_1, %c0_2], %2 {strides = array<i32>} : memref<8x1xf32, #tpu.memory_space<vmem>>, vector<8x1xf32>,
    return
  }
  func.func @transform_0(%arg0: i32) -> (i32, i32) {
    %c0_i32 = arith.constant 0 : i32
    %c0_i32_0 = arith.constant 0 : i32
    return %arg0, %c0_i32 : i32, i32
  }
  func.func @transform_1(%arg0: i32) -> (i32, i32) {
    %c0_i32 = arith.constant 0 : i32
    %c0_i32_0 = arith.constant 0 : i32
    return %arg0, %c0_i32 : i32, i32
  }
}

</mosaic_0001>

<llo_original>
// kernel: tpu_custom_call.1
$region0: #{tpu_custom_call.1}
  #allocation0 [shape = 'u32[]', space=smem, size = 0x4, offset = 0x4, fixed_abs, tag = 'smem constant byte address 0x4 - core index']
  #allocation1 [shape = 'u32[144,128]{1,0:T(1,128)}', space=vmem, size = 0x12000, scoped, tag = 'internal scratch']
  %s0 = inlined_call_operand.hbm [shape: f32[8,256], index: 0, kind: input, shape index: {}]
  %s1 = inlined_call_operand.vmem [shape: f32[8,1], index: 1, kind: output, shape index: {}]
  %s2 = sld [smem:[#allocation0]]
  $region18: #{tpu_custom_call.1} parent=0
    _
  %s4 = ssub.s32 1, %s2
  %s5 = scalar_select 0, %s4, %s2
  $region1: #{tpu_custom_call.1} parent=0
    #allocation2 [shape = 'u8[8192]{0}', space=vmem, size = 0x2000, scoped, tag = 'input window, operand 0, single buffered']
    #allocation3 [shape = 's32[1]{0}', space=sflag, size = 0x4, scoped, tag = 'scoped memory for tpu_custom_call.1']
    %6 = vsyncpa [#allocation3], 0
    // Predicated region
    $region2: #{tpu_custom_call.1} parent=1 // pred_check
      _
    $region3: #{tpu_custom_call.1} parent=1 // pred_check_branch
      %8 = sbr.rel (0) target = $region5
    $region4: #{tpu_custom_call.1} parent=1 // pred_region
      %s10 = ssub.s32 256, 256
      %11 = vsyncadd [#allocation3], %s10
      %s13 = sshll.u32 [#allocation2], 4
      %s14 = int_to_ptr.vmem [resolvable:$true] %s13
      %16 = dma.hbm_to_vmem [thread:$0]  %s0, 256, %s14, [#allocation3]
    $region5: #{tpu_custom_call.1} parent=1 // pred_fallthru
      _
    // Predicated region
    $region6: #{tpu_custom_call.1} parent=1 // pred_check
      _
    $region7: #{tpu_custom_call.1} parent=1 // pred_check_branch
      %18 = sbr.rel (0) target = $region9
    $region8: #{tpu_custom_call.1} parent=1 // pred_region
      %19 = dma.done [#allocation3], 256
    $region9: #{tpu_custom_call.1} parent=1 // pred_fallthru
      _
    %v20 = vld [vmem:[#allocation2] sm:$0xff]
    %v21 = vld [vmem:[#allocation2 + $0x8] sm:$0xff]
    %v22 = vmax.f32 %v20, %v21
    %23 = vmax.xlane.f32.xlu0 %v22
    %v24 = vpop.xlane.xlu0 %23
    %vm25 = vcmask 7168
    %26 = vst.msk [vmem:[%s1] sm:$0xff] %vm25, %v24
    // Predicated region
    $region10: #{tpu_custom_call.1} parent=1 // pred_check
      _
    $region11: #{tpu_custom_call.1} parent=1 // pred_check_branch
      %28 = sbr.rel (0) target = $region13
    $region12: #{tpu_custom_call.1} parent=1 // pred_region
      _
    $region13: #{tpu_custom_call.1} parent=1 // pred_fallthru
      _
    // Predicated region
    $region14: #{tpu_custom_call.1} parent=1 // pred_check
      _
    $region15: #{tpu_custom_call.1} parent=1 // pred_check_branch
      %30 = sbr.rel (0) target = $region17
    $region16: #{tpu_custom_call.1} parent=1 // pred_region
      _
    $region17: #{tpu_custom_call.1} parent=1 // pred_fallthru
      _
    %31 = vsyncpa [#allocation3], 1

</llo_original>
